<compile_context>
chip_gen: v5e
topology: v5e:2x2
jax: 0.10.0
libtpu: 0.0.40
codegen_flags: <defaults>
</compile_context>

<pallas_src>
import jax
import jax.numpy as jnp
from jax import lax
from jax.experimental import pallas as pl
from jax.experimental.pallas import tpu as pltpu

LANES = 128   # vreg lane width
HIDDEN = 9    # Linear(1, 9) hidden width


def _cdiv(a, b):
    return -(-a // b)


def gen_kernel(x_ref, w1p_ref, b1p_ref, w2nn_ref, b2_ref, out_ref):
    # x_ref/out_ref: (tr, 128) f32 VMEM tiles.
    # w1p/b1p: (9,) f32 SMEM folded params (w1*w2, b1*w2).
    # w2nn:    (9,) i32 SMEM flags, 1 where w2[j] >= 0 else 0.
    # b2:      (1,) f32 SMEM.
    x = x_ref[...]

    def term(j):
        t = x * w1p_ref[j] + b1p_ref[j]
        # relu(x*w1[j]+b1[j]) * w2[j]  ==  max(t,0) if w2[j]>=0 else min(t,0)
        # (scalar-predicated branch: costs only a scalar-slot scf.if per tile)
        return lax.cond(
            w2nn_ref[j] == 1,
            lambda v: jnp.maximum(v, 0.0),
            lambda v: jnp.minimum(v, 0.0),
            t,
        )

    acc = term(0)                        # seed accumulator (no b2 splat)
    for j in range(1, HIDDEN):           # statically unrolled
        acc = acc + term(j)
    out_ref[...] = jnp.maximum(acc + b2_ref[0], 0.0)   # + b2 (scalar) , final ReLU


def gen_forward(x, w1, b1, w2, b2, tile_rows=2048):
    """x: (N, 1) float32.  w1, b1, w2: (9,), b2: (1,).  Returns (N, 1) float32."""
    assert tile_rows % 8 == 0, "tile_rows must be a multiple of 8 (sublane)"
    n = x.shape[0]
    rows = _cdiv(n, LANES)
    n_pad = rows * LANES

    # Host-side param folding (9 elements each; negligible cost).
    w1p = (w1 * w2).astype(jnp.float32)
    b1p = (b1 * w2).astype(jnp.float32)
    w2nn = (w2 >= 0).astype(jnp.int32)
    b2f = b2.astype(jnp.float32)

    # Lane-dense 2D view; pad only up to the next multiple of 128 (free when
    # N is already lane-aligned).
    x_flat = x.reshape(-1).astype(jnp.float32)
    if n_pad != n:
        x_flat = jnp.concatenate([x_flat, jnp.zeros((n_pad - n,), jnp.float32)])
    x2d = x_flat.reshape(rows, LANES)

    # Row tile: as large as possible to amortize per-grid-step overhead, but
    # capped at ~half the rows so non-tiny inputs keep >= 2 grid steps
    # (both v7x TensorCores get work via the "parallel" batch axis).
    if rows <= 16:
        tr = rows                                  # single full-array block
    else:
        half = _cdiv(_cdiv(rows, 2), 8) * 8        # ceil(rows/2) rounded up to 8
        tr = min(tile_rows, half)
    grid = _cdiv(rows, tr)                         # partial last block handled by Pallas

    out2d = pl.pallas_call(
        gen_kernel,
        out_shape=jax.ShapeDtypeStruct((rows, LANES), jnp.float32),
        grid_spec=pltpu.PrefetchScalarGridSpec(
            num_scalar_prefetch=0,
            grid=(grid,),
            in_specs=[
                pl.BlockSpec((tr, LANES), lambda i: (i, 0)),            # x tile
                pl.BlockSpec(memory_space=pltpu.MemorySpace.SMEM),      # w1*w2  (9,)
                pl.BlockSpec(memory_space=pltpu.MemorySpace.SMEM),      # b1*w2  (9,)
                pl.BlockSpec(memory_space=pltpu.MemorySpace.SMEM),      # w2>=0  (9,) i32
                pl.BlockSpec(memory_space=pltpu.MemorySpace.SMEM),      # b2     (1,)
            ],
            out_specs=pl.BlockSpec((tr, LANES), lambda i: (i, 0)),
        ),
        compiler_params=pltpu.CompilerParams(
            dimension_semantics=("parallel",)   # independent row tiles (2 TCs on v7x)
        ),
    )(x2d, w1p, b1p, w2nn, b2f)

    # Drop padded tail lanes (their values are garbage, not zero).
    out_flat = out2d.reshape(-1)
    if n_pad != n:
        out_flat = out_flat[:n]
    return out_flat.reshape(n, 1)


def init_params(key):
    """Deterministic init mimicking torch.nn.Linear (uniform +-1/sqrt(fan_in))."""
    k1, k2, k3, k4 = jax.random.split(key, 4)
    bound1 = 1.0                        # 1/sqrt(1)
    w1 = jax.random.uniform(k1, (HIDDEN,), jnp.float32, -bound1, bound1)  # Linear(1,9) w
    b1 = jax.random.uniform(k2, (HIDDEN,), jnp.float32, -bound1, bound1)
    bound2 = 1.0 / 3.0                  # 1/sqrt(9)
    w2 = jax.random.uniform(k3, (HIDDEN,), jnp.float32, -bound2, bound2)  # Linear(9,1) w
    b2 = jax.random.uniform(k4, (1,), jnp.float32, -bound2, bound2)
    return w1, b1, w2, b2


def reference_forward(x, w1, b1, w2, b2):
    h = jnp.maximum(x * w1[None, :] + b1[None, :], 0.0)      # (N, 9)
    y = jnp.maximum(h @ w2[:, None] + b2[None, :], 0.0)      # (N, 1)
    return y


if __name__ == "__main__":
    key = jax.random.PRNGKey(0)
    kx, kp = jax.random.split(key)
    w1, b1, w2, b2 = init_params(kp)

    # 1) Small ragged batch: padding + single full-array block.
    x_small = jax.random.normal(kx, (8, 1), jnp.float32)
    out_small = jax.block_until_ready(gen_forward(x_small, w1, b1, w2, b2))
    ref_small = reference_forward(x_small, w1, b1, w2, b2)
    assert out_small.shape == (8, 1)
    assert jnp.allclose(out_small, ref_small, atol=1e-5, rtol=1e-5), "mismatch (small)"

    # 2) Lane-aligned batch: no-pad / no-copy fast path.
    x_al = jax.random.normal(kx, (512, 1), jnp.float32)
    out_al = jax.block_until_ready(gen_forward(x_al, w1, b1, w2, b2))
    ref_al = reference_forward(x_al, w1, b1, w2, b2)
    assert out_al.shape == (512, 1)
    assert jnp.allclose(out_al, ref_al, atol=1e-5, rtol=1e-5), "mismatch (aligned)"

    # 3) Multi-tile path with an exactly-dividing tile (grid = 3).
    x_big = jax.random.normal(kx, (3000, 1), jnp.float32)
    out_big = jax.block_until_ready(gen_forward(x_big, w1, b1, w2, b2, tile_rows=8))
    ref_big = reference_forward(x_big, w1, b1, w2, b2)
    assert out_big.shape == (3000, 1)
    assert jnp.allclose(out_big, ref_big, atol=1e-5, rtol=1e-5), "mismatch (tiled)"

    # 4) Multi-tile path with a partial final block (rows=24, tile=16 -> blocks 16+8).
    out_part = jax.block_until_ready(gen_forward(x_big, w1, b1, w2, b2, tile_rows=16))
    assert jnp.allclose(out_part, ref_big, atol=1e-5, rtol=1e-5), "mismatch (partial blk)"

    print("KERNEL_OK")
</pallas_src>

<mosaic_0001>
module attributes {stable_mosaic.version = 11 : i64} {
  func.func @gen_kernel(%arg0: i32, %arg1: memref<1x128xf32, #tpu.memory_space<vmem>>, %arg2: memref<9xf32, #tpu.memory_space<smem>>, %arg3: memref<9xf32, #tpu.memory_space<smem>>, %arg4: memref<9xi32, #tpu.memory_space<smem>>, %arg5: memref<1xf32, #tpu.memory_space<smem>>, %arg6: memref<1x128xf32, #tpu.memory_space<vmem>>) attributes {dimension_semantics = [#tpu.dimension_semantics<parallel>], iteration_bounds = array<i64: 1>, scalar_prefetch = 0 : i64, scratch_operands = 0 : i64, tpu.core_type = #tpu.core_type<tc>, window_params = [{transform_indices = @transform_0, window_bounds = array<i64: 1, 128>}, {transform_indices = @transform_1, window_bounds = array<i64: 9>}, {transform_indices = @transform_2, window_bounds = array<i64: 9>}, {transform_indices = @transform_3, window_bounds = array<i64: 9>}, {transform_indices = @transform_4, window_bounds = array<i64: 1>}, {transform_indices = @transform_5, window_bounds = array<i64: 1, 128>}]} {
    %c0 = arith.constant 0 : index
    %c0_0 = arith.constant 0 : index
    %0 = vector.load %arg1[%c0, %c0_0] : memref<1x128xf32, #tpu.memory_space<vmem>>, vector<1x128xf32>
    %c0_1 = arith.constant 0 : index
    %1 = memref.load %arg2[%c0_1] : memref<9xf32, #tpu.memory_space<smem>>
    %2 = vector.broadcast %1 : f32 to vector<1x128xf32>
    %3 = arith.mulf %0, %2 : vector<1x128xf32>
    %c0_2 = arith.constant 0 : index
    %4 = memref.load %arg3[%c0_2] : memref<9xf32, #tpu.memory_space<smem>>
    %5 = vector.broadcast %4 : f32 to vector<1x128xf32>
    %6 = arith.addf %3, %5 : vector<1x128xf32>
    %c0_3 = arith.constant 0 : index
    %7 = memref.load %arg4[%c0_3] : memref<9xi32, #tpu.memory_space<smem>>
    %c1_i32 = arith.constant 1 : i32
    %8 = arith.cmpi eq, %7, %c1_i32 : i32
    %9 = arith.extui %8 : i1 to i32
    %c0_i32 = arith.constant 0 : i32
    %10 = arith.cmpi ne, %9, %c0_i32 : i32
    %11 = scf.if %10 -> (vector<1x128xf32>) {
      %cst_39 = arith.constant 0.000000e+00 : f32
      %114 = vector.broadcast %cst_39 : f32 to vector<1x128xf32>
      %115 = arith.maximumf %6, %114 : vector<1x128xf32>
      scf.yield %115 : vector<1x128xf32>
    } else {
      %cst_39 = arith.constant 0.000000e+00 : f32
      %114 = vector.broadcast %cst_39 : f32 to vector<1x128xf32>
      %115 = arith.minimumf %6, %114 : vector<1x128xf32>
      scf.yield %115 : vector<1x128xf32>
    }
    %c1 = arith.constant 1 : index
    %12 = memref.load %arg2[%c1] : memref<9xf32, #tpu.memory_space<smem>>
    %13 = vector.broadcast %12 : f32 to vector<1x128xf32>
    %14 = arith.mulf %0, %13 : vector<1x128xf32>
    %c1_4 = arith.constant 1 : index
    %15 = memref.load %arg3[%c1_4] : memref<9xf32, #tpu.memory_space<smem>>
    %16 = vector.broadcast %15 : f32 to vector<1x128xf32>
    %17 = arith.addf %14, %16 : vector<1x128xf32>
    %c1_5 = arith.constant 1 : index
    %18 = memref.load %arg4[%c1_5] : memref<9xi32, #tpu.memory_space<smem>>
    %c1_i32_6 = arith.constant 1 : i32
    %19 = arith.cmpi eq, %18, %c1_i32_6 : i32
    %20 = arith.extui %19 : i1 to i32
    %c0_i32_7 = arith.constant 0 : i32
    %21 = arith.cmpi ne, %20, %c0_i32_7 : i32
    %22 = scf.if %21 -> (vector<1x128xf32>) {
      %cst_39 = arith.constant 0.000000e+00 : f32
      %114 = vector.broadcast %cst_39 : f32 to vector<1x128xf32>
      %115 = arith.maximumf %17, %114 : vector<1x128xf32>
      scf.yield %115 : vector<1x128xf32>
    } else {
      %cst_39 = arith.constant 0.000000e+00 : f32
      %114 = vector.broadcast %cst_39 : f32 to vector<1x128xf32>
      %115 = arith.minimumf %17, %114 : vector<1x128xf32>
      scf.yield %115 : vector<1x128xf32>
    }
    %23 = arith.addf %11, %22 : vector<1x128xf32>
    %c2 = arith.constant 2 : index
    %24 = memref.load %arg2[%c2] : memref<9xf32, #tpu.memory_space<smem>>
    %25 = vector.broadcast %24 : f32 to vector<1x128xf32>
    %26 = arith.mulf %0, %25 : vector<1x128xf32>
    %c2_8 = arith.constant 2 : index
    %27 = memref.load %arg3[%c2_8] : memref<9xf32, #tpu.memory_space<smem>>
    %28 = vector.broadcast %27 : f32 to vector<1x128xf32>
    %29 = arith.addf %26, %28 : vector<1x128xf32>
    %c2_9 = arith.constant 2 : index
    %30 = memref.load %arg4[%c2_9] : memref<9xi32, #tpu.memory_space<smem>>
    %c1_i32_10 = arith.constant 1 : i32
    %31 = arith.cmpi eq, %30, %c1_i32_10 : i32
    %32 = arith.extui %31 : i1 to i32
    %c0_i32_11 = arith.constant 0 : i32
    %33 = arith.cmpi ne, %32, %c0_i32_11 : i32
    %34 = scf.if %33 -> (vector<1x128xf32>) {
      %cst_39 = arith.constant 0.000000e+00 : f32
      %114 = vector.broadcast %cst_39 : f32 to vector<1x128xf32>
      %115 = arith.maximumf %29, %114 : vector<1x128xf32>
      scf.yield %115 : vector<1x128xf32>
    } else {
      %cst_39 = arith.constant 0.000000e+00 : f32
      %114 = vector.broadcast %cst_39 : f32 to vector<1x128xf32>
      %115 = arith.minimumf %29, %114 : vector<1x128xf32>
      scf.yield %115 : vector<1x128xf32>
    }
    %35 = arith.addf %23, %34 : vector<1x128xf32>
    %c3 = arith.constant 3 : index
    %36 = memref.load %arg2[%c3] : memref<9xf32, #tpu.memory_space<smem>>
    %37 = vector.broadcast %36 : f32 to vector<1x128xf32>
    %38 = arith.mulf %0, %37 : vector<1x128xf32>
    %c3_12 = arith.constant 3 : index
    %39 = memref.load %arg3[%c3_12] : memref<9xf32, #tpu.memory_space<smem>>
    %40 = vector.broadcast %39 : f32 to vector<1x128xf32>
    %41 = arith.addf %38, %40 : vector<1x128xf32>
    %c3_13 = arith.constant 3 : index
    %42 = memref.load %arg4[%c3_13] : memref<9xi32, #tpu.memory_space<smem>>
    %c1_i32_14 = arith.constant 1 : i32
    %43 = arith.cmpi eq, %42, %c1_i32_14 : i32
    %44 = arith.extui %43 : i1 to i32
    %c0_i32_15 = arith.constant 0 : i32
    %45 = arith.cmpi ne, %44, %c0_i32_15 : i32
    %46 = scf.if %45 -> (vector<1x128xf32>) {
      %cst_39 = arith.constant 0.000000e+00 : f32
      %114 = vector.broadcast %cst_39 : f32 to vector<1x128xf32>
      %115 = arith.maximumf %41, %114 : vector<1x128xf32>
      scf.yield %115 : vector<1x128xf32>
    } else {
      %cst_39 = arith.constant 0.000000e+00 : f32
      %114 = vector.broadcast %cst_39 : f32 to vector<1x128xf32>
      %115 = arith.minimumf %41, %114 : vector<1x128xf32>
      scf.yield %115 : vector<1x128xf32>
    }
    %47 = arith.addf %35, %46 : vector<1x128xf32>
    %c4 = arith.constant 4 : index
    %48 = memref.load %arg2[%c4] : memref<9xf32, #tpu.memory_space<smem>>
    %49 = vector.broadcast %48 : f32 to vector<1x128xf32>
    %50 = arith.mulf %0, %49 : vector<1x128xf32>
    %c4_16 = arith.constant 4 : index
    %51 = memref.load %arg3[%c4_16] : memref<9xf32, #tpu.memory_space<smem>>
    %52 = vector.broadcast %51 : f32 to vector<1x128xf32>
    %53 = arith.addf %50, %52 : vector<1x128xf32>
    %c4_17 = arith.constant 4 : index
    %54 = memref.load %arg4[%c4_17] : memref<9xi32, #tpu.memory_space<smem>>
    %c1_i32_18 = arith.constant 1 : i32
    %55 = arith.cmpi eq, %54, %c1_i32_18 : i32
    %56 = arith.extui %55 : i1 to i32
    %c0_i32_19 = arith.constant 0 : i32
    %57 = arith.cmpi ne, %56, %c0_i32_19 : i32
    %58 = scf.if %57 -> (vector<1x128xf32>) {
      %cst_39 = arith.constant 0.000000e+00 : f32
      %114 = vector.broadcast %cst_39 : f32 to vector<1x128xf32>
      %115 = arith.maximumf %53, %114 : vector<1x128xf32>
      scf.yield %115 : vector<1x128xf32>
    } else {
      %cst_39 = arith.constant 0.000000e+00 : f32
      %114 = vector.broadcast %cst_39 : f32 to vector<1x128xf32>
      %115 = arith.minimumf %53, %114 : vector<1x128xf32>
      scf.yield %115 : vector<1x128xf32>
    }
    %59 = arith.addf %47, %58 : vector<1x128xf32>
    %c5 = arith.constant 5 : index
    %60 = memref.load %arg2[%c5] : memref<9xf32, #tpu.memory_space<smem>>
    %61 = vector.broadcast %60 : f32 to vector<1x128xf32>
    %62 = arith.mulf %0, %61 : vector<1x128xf32>
    %c5_20 = arith.constant 5 : index
    %63 = memref.load %arg3[%c5_20] : memref<9xf32, #tpu.memory_space<smem>>
    %64 = vector.broadcast %63 : f32 to vector<1x128xf32>
    %65 = arith.addf %62, %64 : vector<1x128xf32>
    %c5_21 = arith.constant 5 : index
    %66 = memref.load %arg4[%c5_21] : memref<9xi32, #tpu.memory_space<smem>>
    %c1_i32_22 = arith.constant 1 : i32
    %67 = arith.cmpi eq, %66, %c1_i32_22 : i32
    %68 = arith.extui %67 : i1 to i32
    %c0_i32_23 = arith.constant 0 : i32
    %69 = arith.cmpi ne, %68, %c0_i32_23 : i32
    %70 = scf.if %69 -> (vector<1x128xf32>) {
      %cst_39 = arith.constant 0.000000e+00 : f32
      %114 = vector.broadcast %cst_39 : f32 to vector<1x128xf32>
      %115 = arith.maximumf %65, %114 : vector<1x128xf32>
      scf.yield %115 : vector<1x128xf32>
    } else {
      %cst_39 = arith.constant 0.000000e+00 : f32
      %114 = vector.broadcast %cst_39 : f32 to vector<1x128xf32>
      %115 = arith.minimumf %65, %114 : vector<1x128xf32>
      scf.yield %115 : vector<1x128xf32>
    }
    %71 = arith.addf %59, %70 : vector<1x128xf32>
    %c6 = arith.constant 6 : index
    %72 = memref.load %arg2[%c6] : memref<9xf32, #tpu.memory_space<smem>>
    %73 = vector.broadcast %72 : f32 to vector<1x128xf32>
    %74 = arith.mulf %0, %73 : vector<1x128xf32>
    %c6_24 = arith.constant 6 : index
    %75 = memref.load %arg3[%c6_24] : memref<9xf32, #tpu.memory_space<smem>>
    %76 = vector.broadcast %75 : f32 to vector<1x128xf32>
    %77 = arith.addf %74, %76 : vector<1x128xf32>
    %c6_25 = arith.constant 6 : index
    %78 = memref.load %arg4[%c6_25] : memref<9xi32, #tpu.memory_space<smem>>
    %c1_i32_26 = arith.constant 1 : i32
    %79 = arith.cmpi eq, %78, %c1_i32_26 : i32
    %80 = arith.extui %79 : i1 to i32
    %c0_i32_27 = arith.constant 0 : i32
    %81 = arith.cmpi ne, %80, %c0_i32_27 : i32
    %82 = scf.if %81 -> (vector<1x128xf32>) {
      %cst_39 = arith.constant 0.000000e+00 : f32
      %114 = vector.broadcast %cst_39 : f32 to vector<1x128xf32>
      %115 = arith.maximumf %77, %114 : vector<1x128xf32>
      scf.yield %115 : vector<1x128xf32>
    } else {
      %cst_39 = arith.constant 0.000000e+00 : f32
      %114 = vector.broadcast %cst_39 : f32 to vector<1x128xf32>
      %115 = arith.minimumf %77, %114 : vector<1x128xf32>
      scf.yield %115 : vector<1x128xf32>
    }
    %83 = arith.addf %71, %82 : vector<1x128xf32>
    %c7 = arith.constant 7 : index
    %84 = memref.load %arg2[%c7] : memref<9xf32, #tpu.memory_space<smem>>
    %85 = vector.broadcast %84 : f32 to vector<1x128xf32>
    %86 = arith.mulf %0, %85 : vector<1x128xf32>
    %c7_28 = arith.constant 7 : index
    %87 = memref.load %arg3[%c7_28] : memref<9xf32, #tpu.memory_space<smem>>
    %88 = vector.broadcast %87 : f32 to vector<1x128xf32>
    %89 = arith.addf %86, %88 : vector<1x128xf32>
    %c7_29 = arith.constant 7 : index
    %90 = memref.load %arg4[%c7_29] : memref<9xi32, #tpu.memory_space<smem>>
    %c1_i32_30 = arith.constant 1 : i32
    %91 = arith.cmpi eq, %90, %c1_i32_30 : i32
    %92 = arith.extui %91 : i1 to i32
    %c0_i32_31 = arith.constant 0 : i32
    %93 = arith.cmpi ne, %92, %c0_i32_31 : i32
    %94 = scf.if %93 -> (vector<1x128xf32>) {
      %cst_39 = arith.constant 0.000000e+00 : f32
      %114 = vector.broadcast %cst_39 : f32 to vector<1x128xf32>
      %115 = arith.maximumf %89, %114 : vector<1x128xf32>
      scf.yield %115 : vector<1x128xf32>
    } else {
      %cst_39 = arith.constant 0.000000e+00 : f32
      %114 = vector.broadcast %cst_39 : f32 to vector<1x128xf32>
      %115 = arith.minimumf %89, %114 : vector<1x128xf32>
      scf.yield %115 : vector<1x128xf32>
    }
    %95 = arith.addf %83, %94 : vector<1x128xf32>
    %c8 = arith.constant 8 : index
    %96 = memref.load %arg2[%c8] : memref<9xf32, #tpu.memory_space<smem>>
    %97 = vector.broadcast %96 : f32 to vector<1x128xf32>
    %98 = arith.mulf %0, %97 : vector<1x128xf32>
    %c8_32 = arith.constant 8 : index
    %99 = memref.load %arg3[%c8_32] : memref<9xf32, #tpu.memory_space<smem>>
    %100 = vector.broadcast %99 : f32 to vector<1x128xf32>
    %101 = arith.addf %98, %100 : vector<1x128xf32>
    %c8_33 = arith.constant 8 : index
    %102 = memref.load %arg4[%c8_33] : memref<9xi32, #tpu.memory_space<smem>>
    %c1_i32_34 = arith.constant 1 : i32
    %103 = arith.cmpi eq, %102, %c1_i32_34 : i32
    %104 = arith.extui %103 : i1 to i32
    %c0_i32_35 = arith.constant 0 : i32
    %105 = arith.cmpi ne, %104, %c0_i32_35 : i32
    %106 = scf.if %105 -> (vector<1x128xf32>) {
      %cst_39 = arith.constant 0.000000e+00 : f32
      %114 = vector.broadcast %cst_39 : f32 to vector<1x128xf32>
      %115 = arith.maximumf %101, %114 : vector<1x128xf32>
      scf.yield %115 : vector<1x128xf32>
    } else {
      %cst_39 = arith.constant 0.000000e+00 : f32
      %114 = vector.broadcast %cst_39 : f32 to vector<1x128xf32>
      %115 = arith.minimumf %101, %114 : vector<1x128xf32>
      scf.yield %115 : vector<1x128xf32>
    }
    %107 = arith.addf %95, %106 : vector<1x128xf32>
    %c0_36 = arith.constant 0 : index
    %108 = memref.load %arg5[%c0_36] : memref<1xf32, #tpu.memory_space<smem>>
    %109 = vector.broadcast %108 : f32 to vector<1x128xf32>
    %110 = arith.addf %107, %109 : vector<1x128xf32>
    %cst = arith.constant 0.000000e+00 : f32
    %111 = vector.broadcast %cst : f32 to vector<1x128xf32>
    %112 = arith.maximumf %110, %111 : vector<1x128xf32>
    %c0_37 = arith.constant 0 : index
    %c0_38 = arith.constant 0 : index
    %113 = vector.load %arg6[%c0_37, %c0_38] : memref<1x128xf32, #tpu.memory_space<vmem>>, vector<1x128xf32>
    tpu.vector_store %arg6[%c0_37, %c0_38], %112 {strides = array<i32>} : memref<1x128xf32, #tpu.memory_space<vmem>>, vector<1x128xf32>,
    return
  }
  func.func @transform_0(%arg0: i32) -> (i32, i32) {
    %c0_i32 = arith.constant 0 : i32
    %c0_i32_0 = arith.constant 0 : i32
    return %arg0, %c0_i32 : i32, i32
  }
  func.func @transform_1(%arg0: i32) -> i32 {
    %c0_i32 = arith.constant 0 : i32
    %c0_i32_0 = arith.constant 0 : i32
    return %c0_i32 : i32
  }
  func.func @transform_2(%arg0: i32) -> i32 {
    %c0_i32 = arith.constant 0 : i32
    %c0_i32_0 = arith.constant 0 : i32
    return %c0_i32 : i32
  }
  func.func @transform_3(%arg0: i32) -> i32 {
    %c0_i32 = arith.constant 0 : i32
    %c0_i32_0 = arith.constant 0 : i32
    return %c0_i32 : i32
  }
  func.func @transform_4(%arg0: i32) -> i32 {
    %c0_i32 = arith.constant 0 : i32
    %c0_i32_0 = arith.constant 0 : i32
    return %c0_i32 : i32
  }
  func.func @transform_5(%arg0: i32) -> (i32, i32) {
    %c0_i32 = arith.constant 0 : i32
    %c0_i32_0 = arith.constant 0 : i32
    return %arg0, %c0_i32 : i32, i32
  }
}

</mosaic_0001>

<llo_original>
// kernel: tpu_custom_call.1
$region0: #{tpu_custom_call.1}
  #allocation0 [shape = 'u32[]', space=smem, size = 0x4, offset = 0x4, fixed_abs, tag = 'smem constant byte address 0x4 - core index']
  #allocation1 [shape = 'u32[72,128]{1,0:T(1,128)}', space=vmem, size = 0x9000, scoped, tag = 'internal scratch']
  #allocation2 [shape = 'f32[1]{0:T(128)S(6)}', space=smem, size = 0x200, scoped, tag = 'scoped memory for tpu_custom_call.1']
  %s0 = inlined_call_operand.vmem [shape: f32[1,128], index: 0, kind: input, shape index: {}]
  %s1 = inlined_call_operand.vmem [shape: f32[9], index: 1, kind: input, shape index: {}]
  %s2 = inlined_call_operand.vmem [shape: f32[9], index: 2, kind: input, shape index: {}]
  %s3 = inlined_call_operand.vmem [shape: s32[9], index: 3, kind: input, shape index: {}]
  %s4 = inlined_call_operand.<no memory space> [shape: f32[1], index: 4, kind: input, shape index: {}]
  %s5 = inlined_call_operand.hbm [shape: f32[1,128], index: 5, kind: output, shape index: {}]
  %s6 = sld [smem:[#allocation0]]
  $region114: #{tpu_custom_call.1} parent=0
    _
  %s8 = ssub.s32 1, %s6
  %s9 = scalar_select 0, %s8, %s6
  %10 = sst [smem:[#allocation2]] %s4
  $region1: #{tpu_custom_call.1} parent=0
    #allocation3 [shape = 'u8[512]{0}', space=smem, size = 0x200, scoped, tag = 'input window, operand 1, single buffered']
    #allocation4 [shape = 's32[1]{0}', space=sflag, size = 0x4, scoped, tag = 'scoped memory for tpu_custom_call.1']
    #allocation5 [shape = 's32[1]{0}', space=sflag, size = 0x4, scoped, tag = 'scoped memory for tpu_custom_call.1']
    #allocation6 [shape = 'u8[512]{0}', space=smem, size = 0x200, scoped, tag = 'input window, operand 2, single buffered']
    #allocation7 [shape = 's32[1]{0}', space=sflag, size = 0x4, scoped, tag = 'scoped memory for tpu_custom_call.1']
    #allocation8 [shape = 'u8[512]{0}', space=smem, size = 0x200, scoped, tag = 'input window, operand 3, single buffered']
    #allocation9 [shape = 'u8[512]{0}', space=vmem, size = 0x400, scoped, tag = 'output window, operand 0, single buffered']
    %11 = vsyncpa [#allocation5], 0
    %12 = vsyncpa [#allocation7], 0
    %13 = vsyncpa [#allocation4], 0
    // Predicated region
    $region2: #{tpu_custom_call.1} parent=1 // pred_check
      _
    $region3: #{tpu_custom_call.1} parent=1 // pred_check_branch
      %15 = sbr.rel (0) target = $region5
    $region4: #{tpu_custom_call.1} parent=1 // pred_region
      _
    $region5: #{tpu_custom_call.1} parent=1 // pred_fallthru
      _
    // Predicated region
    $region6: #{tpu_custom_call.1} parent=1 // pred_check
      _
    $region7: #{tpu_custom_call.1} parent=1 // pred_check_branch
      %17 = sbr.rel (0) target = $region9
    $region8: #{tpu_custom_call.1} parent=1 // pred_region
      %19 = vsyncadd [#allocation5], 0
      %s21 = sshll.u32 %s1, 4
      %s22 = int_to_ptr.vmem [resolvable:$true] %s21
      %24 = dma.vmem_to_smem %s22, 16, [#allocation3], [#allocation5]
    $region9: #{tpu_custom_call.1} parent=1 // pred_fallthru
      _
    // Predicated region
    $region10: #{tpu_custom_call.1} parent=1 // pred_check
      _
    $region11: #{tpu_custom_call.1} parent=1 // pred_check_branch
      %26 = sbr.rel (0) target = $region13
    $region12: #{tpu_custom_call.1} parent=1 // pred_region
      %28 = vsyncadd [#allocation7], 0
      %s30 = sshll.u32 %s2, 4
      %s31 = int_to_ptr.vmem [resolvable:$true] %s30
      %33 = dma.vmem_to_smem %s31, 16, [#allocation6], [#allocation7]
    $region13: #{tpu_custom_call.1} parent=1 // pred_fallthru
      _
    // Predicated region
    $region14: #{tpu_custom_call.1} parent=1 // pred_check
      _
    $region15: #{tpu_custom_call.1} parent=1 // pred_check_branch
      %35 = sbr.rel (0) target = $region17
    $region16: #{tpu_custom_call.1} parent=1 // pred_region
      %37 = vsyncadd [#allocation7], 0
      %s39 = sshll.u32 %s3, 4
      %s40 = int_to_ptr.vmem [resolvable:$true] %s39
      %42 = dma.vmem_to_smem %s40, 16, [#allocation8], [#allocation7]
    $region17: #{tpu_custom_call.1} parent=1 // pred_fallthru
      _
    // Predicated region
    $region18: #{tpu_custom_call.1} parent=1 // pred_check
      _
    $region19: #{tpu_custom_call.1} parent=1 // pred_check_branch
      %44 = sbr.rel (0) target = $region21
    $region20: #{tpu_custom_call.1} parent=1 // pred_region
      _
    $region21: #{tpu_custom_call.1} parent=1 // pred_fallthru
      _
    // Predicated region
    $region22: #{tpu_custom_call.1} parent=1 // pred_check
      _
    $region23: #{tpu_custom_call.1} parent=1 // pred_check_branch
      %46 = sbr.rel (0) target = $region25
    $region24: #{tpu_custom_call.1} parent=1 // pred_region
      %48 = dma.done [#allocation5], 16
    $region25: #{tpu_custom_call.1} parent=1 // pred_fallthru
      _
    // Predicated region
    $region26: #{tpu_custom_call.1} parent=1 // pred_check
      _
    $region27: #{tpu_custom_call.1} parent=1 // pred_check_branch
      %50 = sbr.rel (0) target = $region29
    $region28: #{tpu_custom_call.1} parent=1 // pred_region
      %52 = dma.done [#allocation7], 16
    $region29: #{tpu_custom_call.1} parent=1 // pred_fallthru
      _
    // Predicated region
    $region30: #{tpu_custom_call.1} parent=1 // pred_check
      _
    $region31: #{tpu_custom_call.1} parent=1 // pred_check_branch
      %54 = sbr.rel (0) target = $region33
    $region32: #{tpu_custom_call.1} parent=1 // pred_region
      %56 = dma.done [#allocation7], 16
    $region33: #{tpu_custom_call.1} parent=1 // pred_fallthru
      _
    %57 = sfence
    %v58 = vld [vmem:[%s0] sm:$0x1]
    %s59 = sld [smem:[#allocation3]]
    %v60 = vstv %s59
    %v61 = vmul.f32 %v58, %v60
    %s62 = sld [smem:[#allocation6]]
    %v63 = vstv %s62
    %v64 = vadd.f32 %v61, %v63
    %s65 = sld [smem:[#allocation8]]
    %p66 = scmp.eq.s32.totalorder %s65, 1
    // Predicated region
    $region34: #{tpu_custom_call.1} parent=1 // pred_check
      %p67 = pneg %p66
    $region35: #{tpu_custom_call.1} parent=1 // pred_check_branch
      %69 = sbr.rel (%p67) target = $region37
    $region36: #{tpu_custom_call.1} parent=1 // pred_region
      %v70 = vmax.f32 %v64, 0.0
    $region37: #{tpu_custom_call.1} parent=1 // pred_fallthru
      %v71 = vphi 0, %v70
    %p72 = pneg %p66
    // Predicated region
    $region38: #{tpu_custom_call.1} parent=1 // pred_check
      _
    $region39: #{tpu_custom_call.1} parent=1 // pred_check_branch
      %74 = sbr.rel (%p66) target = $region41
    $region40: #{tpu_custom_call.1} parent=1 // pred_region
      %v75 = vmin.f32 %v64, 0.0
    $region41: #{tpu_custom_call.1} parent=1 // pred_fallthru
      %v76 = vphi %v71, %v75
    %s77 = sld [smem:[#allocation3 + $0x1]]
    %v78 = vstv %s77
    %v79 = vmul.f32 %v58, %v78
    %s80 = sld [smem:[#allocation6 + $0x1]]
    %v81 = vstv %s80
    %v82 = vadd.f32 %v79, %v81
    %s83 = sld [smem:[#allocation8 + $0x1]]
    %p84 = scmp.eq.s32.totalorder %s83, 1
    // Predicated region
    $region42: #{tpu_custom_call.1} parent=1 // pred_check
      %p85 = pneg %p84
    $region43: #{tpu_custom_call.1} parent=1 // pred_check_branch
      %87 = sbr.rel (%p85) target = $region45
    $region44: #{tpu_custom_call.1} parent=1 // pred_region
      %v88 = vmax.f32 %v82, 0.0
    $region45: #{tpu_custom_call.1} parent=1 // pred_fallthru
      %v89 = vphi 0, %v88
    %p90 = pneg %p84
    // Predicated region
    $region46: #{tpu_custom_call.1} parent=1 // pred_check
      _
    $region47: #{tpu_custom_call.1} parent=1 // pred_check_branch
      %92 = sbr.rel (%p84) target = $region49
    $region48: #{tpu_custom_call.1} parent=1 // pred_region
      %v93 = vmin.f32 %v82, 0.0
    $region49: #{tpu_custom_call.1} parent=1 // pred_fallthru
      %v94 = vphi %v89, %v93
    %v95 = vadd.f32 %v76, %v94
    %s96 = sld [smem:[#allocation3 + $0x2]]
    %v97 = vstv %s96
    %v98 = vmul.f32 %v58, %v97
    %s99 = sld [smem:[#allocation6 + $0x2]]
    %v100 = vstv %s99
    %v101 = vadd.f32 %v98, %v100
    %s102 = sld [smem:[#allocation8 + $0x2]]
    %p103 = scmp.eq.s32.totalorder %s102, 1
    // Predicated region
    $region50: #{tpu_custom_call.1} parent=1 // pred_check
      %p104 = pneg %p103
    $region51: #{tpu_custom_call.1} parent=1 // pred_check_branch
      %106 = sbr.rel (%p104) target = $region53
    $region52: #{tpu_custom_call.1} parent=1 // pred_region
      %v107 = vmax.f32 %v101, 0.0
    $region53: #{tpu_custom_call.1} parent=1 // pred_fallthru
      %v108 = vphi 0, %v107
    %p109 = pneg %p103
    // Predicated region
    $region54: #{tpu_custom_call.1} parent=1 // pred_check
      _
    $region55: #{tpu_custom_call.1} parent=1 // pred_check_branch
      %111 = sbr.rel (%p103) target = $region57
    $region56: #{tpu_custom_call.1} parent=1 // pred_region
      %v112 = vmin.f32 %v101, 0.0
    $region57: #{tpu_custom_call.1} parent=1 // pred_fallthru
      %v113 = vphi %v108, %v112
    %v114 = vadd.f32 %v95, %v113
    %s115 = sld [smem:[#allocation3 + $0x3]]
    %v116 = vstv %s115
    %v117 = vmul.f32 %v58, %v116
    %s118 = sld [smem:[#allocation6 + $0x3]]
    %v119 = vstv %s118
    %v120 = vadd.f32 %v117, %v119
    %s121 = sld [smem:[#allocation8 + $0x3]]
    %p122 = scmp.eq.s32.totalorder %s121, 1
    // Predicated region
    $region58: #{tpu_custom_call.1} parent=1 // pred_check
      %p123 = pneg %p122
    $region59: #{tpu_custom_call.1} parent=1 // pred_check_branch
      %125 = sbr.rel (%p123) target = $region61
    $region60: #{tpu_custom_call.1} parent=1 // pred_region
      %v126 = vmax.f32 %v120, 0.0
    $region61: #{tpu_custom_call.1} parent=1 // pred_fallthru
      %v127 = vphi 0, %v126
    %p128 = pneg %p122
    // Predicated region
    $region62: #{tpu_custom_call.1} parent=1 // pred_check
      _
    $region63: #{tpu_custom_call.1} parent=1 // pred_check_branch
      %130 = sbr.rel (%p122) target = $region65
    $region64: #{tpu_custom_call.1} parent=1 // pred_region
      %v131 = vmin.f32 %v120, 0.0
    $region65: #{tpu_custom_call.1} parent=1 // pred_fallthru
      %v132 = vphi %v127, %v131
    %v133 = vadd.f32 %v114, %v132
    %s134 = sld [smem:[#allocation3 + $0x4]]
    %v135 = vstv %s134
    %v136 = vmul.f32 %v58, %v135
    %s137 = sld [smem:[#allocation6 + $0x4]]
    %v138 = vstv %s137
    %v139 = vadd.f32 %v136, %v138
    %s140 = sld [smem:[#allocation8 + $0x4]]
    %p141 = scmp.eq.s32.totalorder %s140, 1
    // Predicated region
    $region66: #{tpu_custom_call.1} parent=1 // pred_check
      %p142 = pneg %p141
    $region67: #{tpu_custom_call.1} parent=1 // pred_check_branch
      %144 = sbr.rel (%p142) target = $region69
    $region68: #{tpu_custom_call.1} parent=1 // pred_region
      %v145 = vmax.f32 %v139, 0.0
    $region69: #{tpu_custom_call.1} parent=1 // pred_fallthru
      %v146 = vphi 0, %v145
    %p147 = pneg %p141
    // Predicated region
    $region70: #{tpu_custom_call.1} parent=1 // pred_check
      _
    $region71: #{tpu_custom_call.1} parent=1 // pred_check_branch
      %149 = sbr.rel (%p141) target = $region73
    $region72: #{tpu_custom_call.1} parent=1 // pred_region
      %v150 = vmin.f32 %v139, 0.0
    $region73: #{tpu_custom_call.1} parent=1 // pred_fallthru
      %v151 = vphi %v146, %v150
    %v152 = vadd.f32 %v133, %v151
    %s153 = sld [smem:[#allocation3 + $0x5]]
    %v154 = vstv %s153
    %v155 = vmul.f32 %v58, %v154
    %s156 = sld [smem:[#allocation6 + $0x5]]
    %v157 = vstv %s156
    %v158 = vadd.f32 %v155, %v157
    %s159 = sld [smem:[#allocation8 + $0x5]]
    %p160 = scmp.eq.s32.totalorder %s159, 1
    // Predicated region
    $region74: #{tpu_custom_call.1} parent=1 // pred_check
      %p161 = pneg %p160
    $region75: #{tpu_custom_call.1} parent=1 // pred_check_branch
      %163 = sbr.rel (%p161) target = $region77
    $region76: #{tpu_custom_call.1} parent=1 // pred_region
      %v164 = vmax.f32 %v158, 0.0
    $region77: #{tpu_custom_call.1} parent=1 // pred_fallthru
      %v165 = vphi 0, %v164
    %p166 = pneg %p160
    // Predicated region
    $region78: #{tpu_custom_call.1} parent=1 // pred_check
      _
    $region79: #{tpu_custom_call.1} parent=1 // pred_check_branch
      %168 = sbr.rel (%p160) target = $region81
    $region80: #{tpu_custom_call.1} parent=1 // pred_region
      %v169 = vmin.f32 %v158, 0.0
    $region81: #{tpu_custom_call.1} parent=1 // pred_fallthru
      %v170 = vphi %v165, %v169
    %v171 = vadd.f32 %v152, %v170
    %s172 = sld [smem:[#allocation3 + $0x6]]
    %v173 = vstv %s172
    %v174 = vmul.f32 %v58, %v173
    %s175 = sld [smem:[#allocation6 + $0x6]]
    %v176 = vstv %s175
    %v177 = vadd.f32 %v174, %v176
    %s178 = sld [smem:[#allocation8 + $0x6]]
    %p179 = scmp.eq.s32.totalorder %s178, 1
    // Predicated region
    $region82: #{tpu_custom_call.1} parent=1 // pred_check
      %p180 = pneg %p179
    $region83: #{tpu_custom_call.1} parent=1 // pred_check_branch
      %182 = sbr.rel (%p180) target = $region85
    $region84: #{tpu_custom_call.1} parent=1 // pred_region
      %v183 = vmax.f32 %v177, 0.0
    $region85: #{tpu_custom_call.1} parent=1 // pred_fallthru
      %v184 = vphi 0, %v183
    %p185 = pneg %p179
    // Predicated region
    $region86: #{tpu_custom_call.1} parent=1 // pred_check
      _
    $region87: #{tpu_custom_call.1} parent=1 // pred_check_branch
      %187 = sbr.rel (%p179) target = $region89
    $region88: #{tpu_custom_call.1} parent=1 // pred_region
      %v188 = vmin.f32 %v177, 0.0
    $region89: #{tpu_custom_call.1} parent=1 // pred_fallthru
      %v189 = vphi %v184, %v188
    %v190 = vadd.f32 %v171, %v189
    %s191 = sld [smem:[#allocation3 + $0x7]]
    %v192 = vstv %s191
    %v193 = vmul.f32 %v58, %v192
    %s194 = sld [smem:[#allocation6 + $0x7]]
    %v195 = vstv %s194
    %v196 = vadd.f32 %v193, %v195
    %s197 = sld [smem:[#allocation8 + $0x7]]
    %p198 = scmp.eq.s32.totalorder %s197, 1
    // Predicated region
    $region90: #{tpu_custom_call.1} parent=1 // pred_check
      %p199 = pneg %p198
    $region91: #{tpu_custom_call.1} parent=1 // pred_check_branch
      %201 = sbr.rel (%p199) target = $region93
    $region92: #{tpu_custom_call.1} parent=1 // pred_region
      %v202 = vmax.f32 %v196, 0.0
    $region93: #{tpu_custom_call.1} parent=1 // pred_fallthru
      %v203 = vphi 0, %v202
    %p204 = pneg %p198
    // Predicated region
    $region94: #{tpu_custom_call.1} parent=1 // pred_check
      _
    $region95: #{tpu_custom_call.1} parent=1 // pred_check_branch
      %206 = sbr.rel (%p198) target = $region97
    $region96: #{tpu_custom_call.1} parent=1 // pred_region
      %v207 = vmin.f32 %v196, 0.0
    $region97: #{tpu_custom_call.1} parent=1 // pred_fallthru
      %v208 = vphi %v203, %v207
    %v209 = vadd.f32 %v190, %v208
    %s210 = sld [smem:[#allocation3 + $0x8]]
    %v211 = vstv %s210
    %v212 = vmul.f32 %v58, %v211
    %s213 = sld [smem:[#allocation6 + $0x8]]
    %v214 = vstv %s213
    %v215 = vadd.f32 %v212, %v214
    %s216 = sld [smem:[#allocation8 + $0x8]]
    %p217 = scmp.eq.s32.totalorder %s216, 1
    // Predicated region
    $region98: #{tpu_custom_call.1} parent=1 // pred_check
      %p218 = pneg %p217
    $region99: #{tpu_custom_call.1} parent=1 // pred_check_branch
      %220 = sbr.rel (%p218) target = $region101
    $region100: #{tpu_custom_call.1} parent=1 // pred_region
      %v221 = vmax.f32 %v215, 0.0
    $region101: #{tpu_custom_call.1} parent=1 // pred_fallthru
      %v222 = vphi 0, %v221
    %p223 = pneg %p217
    // Predicated region
    $region102: #{tpu_custom_call.1} parent=1 // pred_check
      _
    $region103: #{tpu_custom_call.1} parent=1 // pred_check_branch
      %225 = sbr.rel (%p217) target = $region105
    $region104: #{tpu_custom_call.1} parent=1 // pred_region
      %v226 = vmin.f32 %v215, 0.0
    $region105: #{tpu_custom_call.1} parent=1 // pred_fallthru
      %v227 = vphi %v222, %v226
    %v228 = vadd.f32 %v209, %v227
    %s229 = sld [smem:[#allocation2]]
    %v230 = vstv %s229
    %v231 = vadd.f32 %v228, %v230
    %v232 = vmax.f32 %v231, 0.0
    %233 = vst [vmem:[#allocation9] sm:$0x1] %v232
    // Predicated region
    $region106: #{tpu_custom_call.1} parent=1 // pred_check
      _
    $region107: #{tpu_custom_call.1} parent=1 // pred_check_branch
      %235 = sbr.rel (0) target = $region109
    $region108: #{tpu_custom_call.1} parent=1 // pred_region
      %237 = vsyncadd [#allocation4], 0
      %s239 = sshll.u32 [#allocation9], 4
      %s240 = int_to_ptr.vmem [resolvable:$true] %s239
      %s241 = sshll.u32 %s5, 4
      %s242 = int_to_ptr.hbm [resolvable:$true] %s241
      %244 = dma.vmem_to_hbm [thread:$0]  %s240, 16, %s242, [#allocation4]
    $region109: #{tpu_custom_call.1} parent=1 // pred_fallthru
      _
    // Predicated region
    $region110: #{tpu_custom_call.1} parent=1 // pred_check
      _
    $region111: #{tpu_custom_call.1} parent=1 // pred_check_branch
      %246 = sbr.rel (0) target = $region113
    $region112: #{tpu_custom_call.1} parent=1 // pred_region
      %248 = dma.done [#allocation4], 16
    $region113: #{tpu_custom_call.1} parent=1 // pred_fallthru
      _
    %249 = vsyncpa [#allocation4], 1
    %250 = vsyncpa [#allocation5], 1
    %251 = vsyncpa [#allocation7], 1

</llo_original>
